<compile_context>
chip_gen: v7x
topology: tpu7x:2x2x1
jax: 0.10.0
libtpu: 0.0.40
codegen_flags: <defaults>
</compile_context>

<pallas_src>
import functools

import jax
import jax.numpy as jnp
import numpy as np
from jax.experimental import pallas as pl
from jax.experimental.pallas import tpu as pltpu


def _round_up(x, m):
    return (x + m - 1) // m * m


# ----------------------------------------------------------------------------- kernel
def mag_kernel(cf_ref, enc_ref, wcf3_ref, wgq_ref, bbig_ref, gamma_ref, beta_ref,
               out_ref, h_all, qss_ref, hss_ref,
               *, num_tiles, tile_n, dim, n_valid):
    p = pl.program_id(0)          # 0: H + norm partial sums, 1: alpha + LN + writeback
    i = pl.program_id(1)          # row-tile index
    D = dim

    # -------------------- pass 0: H tiles + sum-of-squares --------------------
    @pl.when(p == 0)
    def _pass0():
        q = enc_ref[...].astype(jnp.float32)                        # (tn, D)
        # One fused matmul: slot-sum folded into K (W_cf3 = [W_cf; W_cf; W_cf]);
        # carousel_embed_net / gating(meta half) / linear pre-composed on host.
        pre = jnp.dot(cf_ref[...], wcf3_ref[...],
                      preferred_element_type=jnp.float32) + bbig_ref[...]   # (tn, 2D)
        gate = jnp.tanh(pre[:, :D] +
                        jnp.dot(q, wgq_ref[...], preferred_element_type=jnp.float32))
        H = gate * pre[:, D:]                                       # (tn, D)

        if n_valid < num_tiles * tile_n:        # static: only when padded
            row = i * tile_n + jax.lax.broadcasted_iota(jnp.int32, (tile_n, 1), 0)
            H = jnp.where(row < n_valid, H, 0.0)

        h_all[i] = H                                                # resident VMEM

        @pl.when(i == 0)
        def _():
            qss_ref[...] = jnp.zeros_like(qss_ref)
            hss_ref[...] = jnp.zeros_like(hss_ref)

        qss_ref[...] += jnp.sum(q * q).reshape(1, 1)
        hss_ref[...] += jnp.sum(H * H).reshape(1, 1)

    # ---------------- pass 1: alpha + per-tile LayerNorm + fused concat -------
    @pl.when(p == 1)
    def _pass1():
        q = enc_ref[...].astype(jnp.float32)                        # (tn, D)
        # global alpha (matches reference exactly; reference also NaNs if H == 0)
        alpha = jnp.minimum(
            0.75 * jnp.sqrt(qss_ref[...]) / jnp.sqrt(hss_ref[...]), 1.0)    # (1, 1)
        Z = q + alpha * h_all[i]                                    # (tn, D)
        mean = jnp.mean(Z, axis=-1, keepdims=True)
        c = Z - mean
        var = jnp.mean(c * c, axis=-1, keepdims=True)
        zn = c * jax.lax.rsqrt(var + 1e-5) * gamma_ref[...] + beta_ref[...]
        # fused concat([Zn, query], -1): one lane-dense (tn, 2D) store per tile
        out_ref[...] = jnp.concatenate([zn, q], axis=-1).astype(out_ref.dtype)


# ----------------------------------------------------------------------------- param prep
def prepare_mag_params(W_embed, b_embed, W_gate, b_gate, W_lin, b_lin,
                       ln_gamma, ln_beta):
    """One-time weight pre-composition (run once, NOT per forward call).

      meta = cf_mean @ W_embed + b_embed,   cf_sum = 3 * cf_mean
      [gate_meta | lin] = meta @ [W_gm | W_lin] + [b_gate | b_lin]
                        = cf_sum @ ((W_embed/3) @ [W_gm|W_lin]) + ([b_g|b_l] + b_embed @ [W_gm|W_lin])
    and the 3-slot sum is folded into the matmul K dim: cf(N,3F) @ vstack(3 x W_cf).
    """
    F, D = W_embed.shape
    hp = jax.lax.Precision.HIGHEST
    W_meta = jnp.concatenate([W_gate[D:], W_lin], axis=1)                   # (D, 2D)
    W_cf = jnp.dot(W_embed * (1.0 / 3.0), W_meta, precision=hp)             # (F, 2D)
    W_cf3 = jnp.concatenate([W_cf, W_cf, W_cf], axis=0)                     # (3F, 2D)
    W_gq = W_gate[:D]                                                       # (D, D)
    b_big = (jnp.concatenate([b_gate, b_lin]) +
             jnp.dot(b_embed, W_meta, precision=hp)).reshape(1, 2 * D)      # (1, 2D)
    gamma = ln_gamma.reshape(1, D)
    beta = ln_beta.reshape(1, D)
    return W_cf3, W_gq, b_big, gamma, beta


# ----------------------------------------------------------------------------- wrapper
@functools.partial(jax.jit, static_argnames=("tile_n",))
def carousel_embedder_mag(carousel_feats, encoder_state,
                          W_cf3, W_gq, b_big, gamma, beta, tile_n=None):
    N, S, F = carousel_feats.shape
    D = encoder_state.shape[-1]
    assert S == 3
    assert W_cf3.shape == (3 * F, 2 * D)

    # >= 2 tiles (so the cf stream double-buffers), <= 256 rows per tile.
    if tile_n is None:
        tile_n = 8 if N <= 8 else min(256, _round_up(-(-N // 2), 8))
    num_tiles = -(-N // tile_n)
    N_pad = num_tiles * tile_n

    cf2 = carousel_feats.reshape(N, 3 * F)        # lane-dense, free row-major view
    enc = encoder_state
    if N_pad != N:                                # pad only when actually ragged
        cf2 = jnp.pad(cf2, ((0, N_pad - N), (0, 0)))
        enc = jnp.pad(enc, ((0, N_pad - N), (0, 0)))

    out_dtype = encoder_state.dtype

    # Explicit VMEM budget: resident H + double-buffered streams + weights.
    vmem_need = (N_pad * D * 4                                 # h_all (resident)
                 + 2 * tile_n * 3 * F * cf2.dtype.itemsize     # cf double buffer
                 + 2 * tile_n * D * enc.dtype.itemsize         # enc double buffer
                 + 2 * tile_n * 2 * D * 4                      # out double buffer
                 + 2 * (3 * F * 2 * D + D * D + 6 * D) * 4)    # weights / biases / LN
    vmem_limit = min(max(2 * vmem_need, 16 * 1024 * 1024), 64 * 1024 * 1024)

    kernel = functools.partial(mag_kernel, num_tiles=num_tiles, tile_n=tile_n,
                               dim=D, n_valid=N)

    out = pl.pallas_call(
        kernel,
        out_shape=jax.ShapeDtypeStruct((N_pad, 2 * D), out_dtype),
        grid=(2, num_tiles),
        in_specs=[
            # carousel features: streamed in pass 0 only (parks on the last block in pass 1)
            pl.BlockSpec((tile_n, 3 * F),
                         lambda p, i: ((1 - p) * i + p * (num_tiles - 1), 0)),
            # query / encoder_state: re-streamed in both passes (cheap: D lanes per row)
            pl.BlockSpec((tile_n, D), lambda p, i: (i, 0)),
            pl.BlockSpec((3 * F, 2 * D), lambda p, i: (0, 0)),   # fused carousel weight
            pl.BlockSpec((D, D), lambda p, i: (0, 0)),           # gating weight (query half)
            pl.BlockSpec((1, 2 * D), lambda p, i: (0, 0)),       # fused bias
            pl.BlockSpec((1, D), lambda p, i: (0, 0)),           # LN gamma
            pl.BlockSpec((1, D), lambda p, i: (0, 0)),           # LN beta
        ],
        # stays on block 0 during pass 0 (never written there), per-tile writeback in pass 1
        out_specs=pl.BlockSpec((tile_n, 2 * D), lambda p, i: (i * p, 0)),
        scratch_shapes=[
            pltpu.VMEM((num_tiles, tile_n, D), jnp.float32),     # H tiles (resident)
            pltpu.VMEM((1, 1), jnp.float32),                     # sum(q^2)
            pltpu.VMEM((1, 1), jnp.float32),                     # sum(H^2)
        ],
        compiler_params=pltpu.CompilerParams(
            # Global-norm coupling forces a sequential pass structure -> single TC.
            # TODO(synk): for very large N a core-parallel row split with a CMEM
            #             reduction of qss/hss could use v7x's second TensorCore.
            dimension_semantics=("arbitrary", "arbitrary"),
            vmem_limit_bytes=vmem_limit,
        ),
    )(cf2, enc, W_cf3, W_gq, b_big, gamma, beta)

    return out[:N] if N_pad != N else out


# ----------------------------------------------------------------------------- reference
def reference(cf, enc, We, be, Wg, bg, Wl, bl, gamma, beta_ln):
    emb = jnp.einsum("ntf,fd->ntd", cf, We) + be
    meta = emb.mean(axis=1)
    g_v = jnp.tanh(jnp.concatenate([enc, meta], -1) @ Wg + bg)
    H = g_v * (meta @ Wl + bl)
    norms = jnp.sqrt(jnp.sum(enc ** 2)) / jnp.sqrt(jnp.sum(H ** 2)) * 0.75
    alpha = jnp.minimum(norms, 1.0)
    Z = enc + alpha * H
    mean = Z.mean(-1, keepdims=True)
    var = ((Z - mean) ** 2).mean(-1, keepdims=True)
    Zn = (Z - mean) / jnp.sqrt(var + 1e-5) * gamma + beta_ln
    return jnp.concatenate([Zn, enc], -1)


# ----------------------------------------------------------------------------- main
if __name__ == "__main__":
    # module params (synthetic, deterministic)
    word_embed_size = 32          # output_size (text_encoder != 'lstm')
    asset_feature_size = 96
    D = word_embed_size
    F = asset_feature_size + word_embed_size   # carousel_embed_net input (= 128)
    batch_size, num_rounds = 2, 8
    N = batch_size * num_rounds

    key = jax.random.PRNGKey(0)
    keys = jax.random.split(key, 10)

    # carousel position parameters (left/center/right/focus/empty), word_embed_size each
    pos_params = jax.random.normal(keys[0], (5, D), jnp.float32)
    # synthetic 'carousel' round data: 3 asset embeddings per (inst, round)
    asset_embeds = jax.random.normal(keys[1], (N, 3, asset_feature_size), jnp.float32)
    positions3 = jnp.broadcast_to(pos_params[:3][None], (N, 3, D))
    carousel_feats = jnp.concatenate([asset_embeds, positions3], axis=-1)  # (N, 3, F)

    encoder_state = jax.random.normal(keys[2], (N, D), jnp.float32)

    # carousel_embed_net + MAG parameters (deterministic init)
    W_embed = jax.random.normal(keys[3], (F, D), jnp.float32) * 0.05
    b_embed = jax.random.normal(keys[4], (D,), jnp.float32) * 0.05
    W_gate = jax.random.normal(keys[5], (2 * D, D), jnp.float32) * 0.05
    b_gate = jax.random.normal(keys[6], (D,), jnp.float32) * 0.05
    W_lin = jax.random.normal(keys[7], (D, D), jnp.float32) * 0.05
    b_lin = jax.random.normal(keys[8], (D,), jnp.float32) * 0.05
    ln_gamma = jnp.ones((D,), jnp.float32)
    ln_beta = jnp.zeros((D,), jnp.float32)

    # one-time parameter prep (hoisted out of the per-call path)
    prepped = prepare_mag_params(W_embed, b_embed, W_gate, b_gate, W_lin, b_lin,
                                 ln_gamma, ln_beta)
    prepped = jax.tree_util.tree_map(jax.block_until_ready, prepped)

    out = carousel_embedder_mag(carousel_feats, encoder_state, *prepped)
    out = jax.block_until_ready(out)

    ref = reference(carousel_feats, encoder_state, W_embed, b_embed,
                    W_gate, b_gate, W_lin, b_lin, ln_gamma, ln_beta)
    np.testing.assert_allclose(np.asarray(out), np.asarray(ref), rtol=2e-3, atol=2e-3)

    print("KERNEL_OK")
</pallas_src>

<mosaic_0001>
module attributes {stable_mosaic.version = 11 : i64} {
  func.func @mag_kernel(%arg0: i32, %arg1: i32, %arg2: memref<8x384xf32, #tpu.memory_space<vmem>>, %arg3: memref<8x32xf32, #tpu.memory_space<vmem>>, %arg4: memref<384x64xf32, #tpu.memory_space<vmem>>, %arg5: memref<32x32xf32, #tpu.memory_space<vmem>>, %arg6: memref<1x64xf32, #tpu.memory_space<vmem>>, %arg7: memref<1x32xf32, #tpu.memory_space<vmem>>, %arg8: memref<1x32xf32, #tpu.memory_space<vmem>>, %arg9: memref<8x64xf32, #tpu.memory_space<vmem>>, %arg10: memref<2x8x32xf32, #tpu.memory_space<vmem>>, %arg11: memref<1x1xf32, #tpu.memory_space<vmem>>, %arg12: memref<1x1xf32, #tpu.memory_space<vmem>>) attributes {dimension_semantics = [#tpu.dimension_semantics<arbitrary>, #tpu.dimension_semantics<arbitrary>], iteration_bounds = array<i64: 2, 2>, scalar_prefetch = 0 : i64, scratch_operands = 3 : i64, tpu.core_type = #tpu.core_type<tc>, window_params = [{transform_indices = @transform_0, window_bounds = array<i64: 8, 384>}, {transform_indices = @transform_1, window_bounds = array<i64: 8, 32>}, {pipeline_mode = #tpu.pipeline_mode<synchronous>, transform_indices = @transform_2, window_bounds = array<i64: 384, 64>}, {pipeline_mode = #tpu.pipeline_mode<synchronous>, transform_indices = @transform_3, window_bounds = array<i64: 32, 32>}, {pipeline_mode = #tpu.pipeline_mode<synchronous>, transform_indices = @transform_4, window_bounds = array<i64: 1, 64>}, {pipeline_mode = #tpu.pipeline_mode<synchronous>, transform_indices = @transform_5, window_bounds = array<i64: 1, 32>}, {pipeline_mode = #tpu.pipeline_mode<synchronous>, transform_indices = @transform_6, window_bounds = array<i64: 1, 32>}, {transform_indices = @transform_7, window_bounds = array<i64: 8, 64>}]} {
    %c0_i32 = arith.constant 0 : i32
    %0 = arith.cmpi eq, %arg0, %c0_i32 : i32
    %1 = arith.extui %0 : i1 to i32
    %c0_i32_0 = arith.constant 0 : i32
    %2 = arith.cmpi ne, %1, %c0_i32_0 : i32
    scf.if %2 {
      %c0 = arith.constant 0 : index
      %c0_2 = arith.constant 0 : index
      %6 = vector.load %arg3[%c0, %c0_2] : memref<8x32xf32, #tpu.memory_space<vmem>>, vector<8x32xf32>
      %c0_3 = arith.constant 0 : index
      %c0_4 = arith.constant 0 : index
      %7 = vector.load %arg2[%c0_3, %c0_4] : memref<8x384xf32, #tpu.memory_space<vmem>>, vector<8x384xf32>
      %c0_5 = arith.constant 0 : index
      %c0_6 = arith.constant 0 : index
      %8 = vector.load %arg4[%c0_5, %c0_6] : memref<384x64xf32, #tpu.memory_space<vmem>>, vector<384x64xf32>
      %cst = arith.constant dense<0.000000e+00> : vector<8x64xf32>
      %9 = tpu.matmul %7, %8, %cst {dimension_numbers = #tpu.dot_dimension_numbers<[1], [0], [0], [1], [0, 0, 1, 1], [], []>} : vector<8x384xf32>, vector<384x64xf32>, vector<8x64xf32> -> vector<8x64xf32>
      %c0_7 = arith.constant 0 : index
      %c0_8 = arith.constant 0 : index
      %10 = vector.load %arg6[%c0_7, %c0_8] : memref<1x64xf32, #tpu.memory_space<vmem>>, vector<1x64xf32>
      %11 = vector.broadcast %10 : vector<1x64xf32> to vector<8x64xf32>
      %12 = arith.addf %9, %11 : vector<8x64xf32>
      %13 = vector.extract_strided_slice %12 {offsets = [0, 0], sizes = [8, 32], strides = [1, 1]} : vector<8x64xf32> to vector<8x32xf32>
      %c0_9 = arith.constant 0 : index
      %c0_10 = arith.constant 0 : index
      %14 = vector.load %arg5[%c0_9, %c0_10] : memref<32x32xf32, #tpu.memory_space<vmem>>, vector<32x32xf32>
      %cst_11 = arith.constant dense<0.000000e+00> : vector<8x32xf32>
      %15 = tpu.matmul %6, %14, %cst_11 {dimension_numbers = #tpu.dot_dimension_numbers<[1], [0], [0], [1], [0, 0, 1, 1], [], []>} : vector<8x32xf32>, vector<32x32xf32>, vector<8x32xf32> -> vector<8x32xf32>
      %16 = arith.addf %13, %15 : vector<8x32xf32>
      %17 = math.tanh %16 : vector<8x32xf32>
      %18 = vector.extract_strided_slice %12 {offsets = [0, 32], sizes = [8, 32], strides = [1, 1]} : vector<8x64xf32> to vector<8x32xf32>
      %19 = arith.mulf %17, %18 : vector<8x32xf32>
      %20 = arith.index_cast %arg1 : i32 to index
      %c0_12 = arith.constant 0 : index
      %c0_13 = arith.constant 0 : index
      %21 = vector.load %arg10[%20, %c0_12, %c0_13] : memref<2x8x32xf32, #tpu.memory_space<vmem>>, vector<1x8x32xf32>
      %22 = vector.shape_cast %21 : vector<1x8x32xf32> to vector<8x32xf32>
      %23 = vector.shape_cast %19 : vector<8x32xf32> to vector<1x8x32xf32>
      tpu.vector_store %arg10[%20, %c0_12, %c0_13], %23 {strides = array<i32>} : memref<2x8x32xf32, #tpu.memory_space<vmem>>, vector<1x8x32xf32>,
      %c0_i32_14 = arith.constant 0 : i32
      %24 = arith.cmpi eq, %arg1, %c0_i32_14 : i32
      %25 = arith.extui %24 : i1 to i32
      %c0_i32_15 = arith.constant 0 : i32
      %26 = arith.cmpi ne, %25, %c0_i32_15 : i32
      scf.if %26 {
        %cst_26 = arith.constant 0.000000e+00 : f32
        %45 = vector.broadcast %cst_26 : f32 to vector<1x1xf32>
        %c0_27 = arith.constant 0 : index
        %c0_28 = arith.constant 0 : index
        %46 = vector.load %arg11[%c0_27, %c0_28] : memref<1x1xf32, #tpu.memory_space<vmem>>, vector<1x1xf32>
        tpu.vector_store %arg11[%c0_27, %c0_28], %45 {strides = array<i32>} : memref<1x1xf32, #tpu.memory_space<vmem>>, vector<1x1xf32>,
        %cst_29 = arith.constant 0.000000e+00 : f32
        %47 = vector.broadcast %cst_29 : f32 to vector<1x1xf32>
        %c0_30 = arith.constant 0 : index
        %c0_31 = arith.constant 0 : index
        %48 = vector.load %arg12[%c0_30, %c0_31] : memref<1x1xf32, #tpu.memory_space<vmem>>, vector<1x1xf32>
        tpu.vector_store %arg12[%c0_30, %c0_31], %47 {strides = array<i32>} : memref<1x1xf32, #tpu.memory_space<vmem>>, vector<1x1xf32>,
      } else {
      }
      %c0_16 = arith.constant 0 : index
      %c0_17 = arith.constant 0 : index
      %27 = vector.load %arg11[%c0_16, %c0_17] : memref<1x1xf32, #tpu.memory_space<vmem>>, vector<1x1xf32>
      %28 = arith.mulf %6, %6 : vector<8x32xf32>
      %29 = vector.shape_cast %28 : vector<8x32xf32> to vector<1x8x32xf32>
      %cst_18 = arith.constant dense<0.000000e+00> : vector<1xf32>
      %30 = vector.multi_reduction <add>, %29, %cst_18 [1, 2] : vector<1x8x32xf32> to vector<1xf32>
      %31 = vector.shape_cast %30 : vector<1xf32> to vector<1x1x1xf32>
      %32 = vector.extract %31[0, 0, 0] : f32 from vector<1x1x1xf32>
      %33 = vector.broadcast %32 : f32 to vector<1x1xf32>
      %34 = arith.addf %27, %33 : vector<1x1xf32>
      %c0_19 = arith.constant 0 : index
      %c0_20 = arith.constant 0 : index
      %35 = vector.load %arg11[%c0_19, %c0_20] : memref<1x1xf32, #tpu.memory_space<vmem>>, vector<1x1xf32>
      tpu.vector_store %arg11[%c0_19, %c0_20], %34 {strides = array<i32>} : memref<1x1xf32, #tpu.memory_space<vmem>>, vector<1x1xf32>,
      %c0_21 = arith.constant 0 : index
      %c0_22 = arith.constant 0 : index
      %36 = vector.load %arg12[%c0_21, %c0_22] : memref<1x1xf32, #tpu.memory_space<vmem>>, vector<1x1xf32>
      %37 = arith.mulf %19, %19 : vector<8x32xf32>
      %38 = vector.shape_cast %37 : vector<8x32xf32> to vector<1x8x32xf32>
      %cst_23 = arith.constant dense<0.000000e+00> : vector<1xf32>
      %39 = vector.multi_reduction <add>, %38, %cst_23 [1, 2] : vector<1x8x32xf32> to vector<1xf32>
      %40 = vector.shape_cast %39 : vector<1xf32> to vector<1x1x1xf32>
      %41 = vector.extract %40[0, 0, 0] : f32 from vector<1x1x1xf32>
      %42 = vector.broadcast %41 : f32 to vector<1x1xf32>
      %43 = arith.addf %36, %42 : vector<1x1xf32>
      %c0_24 = arith.constant 0 : index
      %c0_25 = arith.constant 0 : index
      %44 = vector.load %arg12[%c0_24, %c0_25] : memref<1x1xf32, #tpu.memory_space<vmem>>, vector<1x1xf32>
      tpu.vector_store %arg12[%c0_24, %c0_25], %43 {strides = array<i32>} : memref<1x1xf32, #tpu.memory_space<vmem>>, vector<1x1xf32>,
    } else {
    }
    %c1_i32 = arith.constant 1 : i32
    %3 = arith.cmpi eq, %arg0, %c1_i32 : i32
    %4 = arith.extui %3 : i1 to i32
    %c0_i32_1 = arith.constant 0 : i32
    %5 = arith.cmpi ne, %4, %c0_i32_1 : i32
    scf.if %5 {
      %c0 = arith.constant 0 : index
      %c0_2 = arith.constant 0 : index
      %6 = vector.load %arg3[%c0, %c0_2] : memref<8x32xf32, #tpu.memory_space<vmem>>, vector<8x32xf32>
      %c0_3 = arith.constant 0 : index
      %c0_4 = arith.constant 0 : index
      %7 = vector.load %arg11[%c0_3, %c0_4] : memref<1x1xf32, #tpu.memory_space<vmem>>, vector<1x1xf32>
      %8 = math.sqrt %7 : vector<1x1xf32>
      %cst = arith.constant 7.500000e-01 : f32
      %9 = vector.broadcast %cst : f32 to vector<1x1xf32>
      %10 = arith.mulf %9, %8 : vector<1x1xf32>
      %c0_5 = arith.constant 0 : index
      %c0_6 = arith.constant 0 : index
      %11 = vector.load %arg12[%c0_5, %c0_6] : memref<1x1xf32, #tpu.memory_space<vmem>>, vector<1x1xf32>
      %12 = math.sqrt %11 : vector<1x1xf32>
      %13 = arith.divf %10, %12 : vector<1x1xf32>
      %cst_7 = arith.constant 1.000000e+00 : f32
      %14 = vector.broadcast %cst_7 : f32 to vector<1x1xf32>
      %15 = arith.minimumf %13, %14 : vector<1x1xf32>
      %16 = arith.index_cast %arg1 : i32 to index
      %c0_8 = arith.constant 0 : index
      %c0_9 = arith.constant 0 : index
      %17 = vector.load %arg10[%16, %c0_8, %c0_9] : memref<2x8x32xf32, #tpu.memory_space<vmem>>, vector<1x8x32xf32>
      %18 = vector.shape_cast %17 : vector<1x8x32xf32> to vector<8x32xf32>
      %19 = vector.broadcast %15 : vector<1x1xf32> to vector<8x32xf32>
      %20 = arith.mulf %19, %18 : vector<8x32xf32>
      %21 = arith.addf %6, %20 : vector<8x32xf32>
      %cst_10 = arith.constant dense<0.000000e+00> : vector<8xf32>
      %22 = vector.multi_reduction <add>, %21, %cst_10 [1] : vector<8x32xf32> to vector<8xf32>
      %23 = vector.shape_cast %22 : vector<8xf32> to vector<8x1xf32>
      %cst_11 = arith.constant 3.200000e+01 : f32
      %24 = vector.broadcast %cst_11 : f32 to vector<8x1xf32>
      %25 = arith.divf %23, %24 : vector<8x1xf32>
      %26 = vector.broadcast %25 : vector<8x1xf32> to vector<8x32xf32>
      %27 = arith.subf %21, %26 : vector<8x32xf32>
      %28 = arith.mulf %27, %27 : vector<8x32xf32>
      %cst_12 = arith.constant dense<0.000000e+00> : vector<8xf32>
      %29 = vector.multi_reduction <add>, %28, %cst_12 [1] : vector<8x32xf32> to vector<8xf32>
      %30 = vector.shape_cast %29 : vector<8xf32> to vector<8x1xf32>
      %cst_13 = arith.constant 3.200000e+01 : f32
      %31 = vector.broadcast %cst_13 : f32 to vector<8x1xf32>
      %32 = arith.divf %30, %31 : vector<8x1xf32>
      %cst_14 = arith.constant 9.99999974E-6 : f32
      %33 = vector.broadcast %cst_14 : f32 to vector<8x1xf32>
      %34 = arith.addf %32, %33 : vector<8x1xf32>
      %35 = math.rsqrt %34 : vector<8x1xf32>
      %36 = vector.broadcast %35 : vector<8x1xf32> to vector<8x32xf32>
      %37 = arith.mulf %27, %36 : vector<8x32xf32>
      %c0_15 = arith.constant 0 : index
      %c0_16 = arith.constant 0 : index
      %38 = vector.load %arg7[%c0_15, %c0_16] : memref<1x32xf32, #tpu.memory_space<vmem>>, vector<1x32xf32>
      %39 = vector.broadcast %38 : vector<1x32xf32> to vector<8x32xf32>
      %40 = arith.mulf %37, %39 : vector<8x32xf32>
      %c0_17 = arith.constant 0 : index
      %c0_18 = arith.constant 0 : index
      %41 = vector.load %arg8[%c0_17, %c0_18] : memref<1x32xf32, #tpu.memory_space<vmem>>, vector<1x32xf32>
      %42 = vector.broadcast %41 : vector<1x32xf32> to vector<8x32xf32>
      %43 = arith.addf %40, %42 : vector<8x32xf32>
      %44 = tpu.concatenate %43, %6 in 1 : vector<8x32xf32>, vector<8x32xf32> -> vector<8x64xf32>
      %c0_19 = arith.constant 0 : index
      %c0_20 = arith.constant 0 : index
      %45 = vector.load %arg9[%c0_19, %c0_20] : memref<8x64xf32, #tpu.memory_space<vmem>>, vector<8x64xf32>
      tpu.vector_store %arg9[%c0_19, %c0_20], %44 {strides = array<i32>} : memref<8x64xf32, #tpu.memory_space<vmem>>, vector<8x64xf32>,
    } else {
    }
    return
  }
  func.func @transform_0(%arg0: i32, %arg1: i32) -> (i32, i32) {
    %c1_i32 = arith.constant 1 : i32
    %0 = arith.subi %c1_i32, %arg0 : i32
    %1 = arith.muli %0, %arg1 : i32
    %c1_i32_0 = arith.constant 1 : i32
    %2 = arith.muli %arg0, %c1_i32_0 : i32
    %3 = arith.addi %1, %2 : i32
    %c0_i32 = arith.constant 0 : i32
    %c0_i32_1 = arith.constant 0 : i32
    return %3, %c0_i32 : i32, i32
  }
  func.func @transform_1(%arg0: i32, %arg1: i32) -> (i32, i32) {
    %c0_i32 = arith.constant 0 : i32
    %c0_i32_0 = arith.constant 0 : i32
    return %arg1, %c0_i32 : i32, i32
  }
  func.func @transform_2(%arg0: i32, %arg1: i32) -> (i32, i32) {
    %c0_i32 = arith.constant 0 : i32
    %c0_i32_0 = arith.constant 0 : i32
    %c0_i32_1 = arith.constant 0 : i32
    return %c0_i32, %c0_i32_0 : i32, i32
  }
  func.func @transform_3(%arg0: i32, %arg1: i32) -> (i32, i32) {
    %c0_i32 = arith.constant 0 : i32
    %c0_i32_0 = arith.constant 0 : i32
    %c0_i32_1 = arith.constant 0 : i32
    return %c0_i32, %c0_i32_0 : i32, i32
  }
  func.func @transform_4(%arg0: i32, %arg1: i32) -> (i32, i32) {
    %c0_i32 = arith.constant 0 : i32
    %c0_i32_0 = arith.constant 0 : i32
    %c0_i32_1 = arith.constant 0 : i32
    return %c0_i32, %c0_i32_0 : i32, i32
  }
  func.func @transform_5(%arg0: i32, %arg1: i32) -> (i32, i32) {
    %c0_i32 = arith.constant 0 : i32
    %c0_i32_0 = arith.constant 0 : i32
    %c0_i32_1 = arith.constant 0 : i32
    return %c0_i32, %c0_i32_0 : i32, i32
  }
  func.func @transform_6(%arg0: i32, %arg1: i32) -> (i32, i32) {
    %c0_i32 = arith.constant 0 : i32
    %c0_i32_0 = arith.constant 0 : i32
    %c0_i32_1 = arith.constant 0 : i32
    return %c0_i32, %c0_i32_0 : i32, i32
  }
  func.func @transform_7(%arg0: i32, %arg1: i32) -> (i32, i32) {
    %0 = arith.muli %arg1, %arg0 : i32
    %c0_i32 = arith.constant 0 : i32
    %c0_i32_0 = arith.constant 0 : i32
    return %0, %c0_i32 : i32, i32
  }
}

</mosaic_0001>

<llo_original>
// kernel: carousel_embedder_mag.1
$region0: #{carousel_embedder_mag.1}
  #allocation0 [shape = 'u32[]', space=smem, size = 0x4, offset = 0x4, fixed_abs, tag = 'smem constant byte address 0x4 - core index']
  #allocation1 [shape = 'u32[144,128]{1,0:T(1,128)}', space=vmem, size = 0x12000, scoped, tag = 'internal scratch']
  #allocation2 [shape = 'f32[2,8,32]{2,1,0:T(8,128)}', space=vmem, size = 0x2000, scoped, tag = 'scratch operand']
  #allocation3 [shape = 'f32[1,1]{1,0:T(1,128)}', space=vmem, size = 0x200, scoped, tag = 'scratch operand']
  #allocation4 [shape = 'f32[1,1]{1,0:T(1,128)}', space=vmem, size = 0x200, scoped, tag = 'scratch operand']
  %s0 = inlined_call_operand.vmem [shape: f32[16,384], index: 0, kind: input, shape index: {}]
  %s1 = inlined_call_operand.vmem [shape: f32[16,32], index: 1, kind: input, shape index: {}]
  %s2 = inlined_call_operand.vmem [shape: f32[384,64], index: 2, kind: input, shape index: {}]
  %s3 = inlined_call_operand.vmem [shape: f32[32,32], index: 3, kind: input, shape index: {}]
  %s4 = inlined_call_operand.vmem [shape: f32[1,64], index: 4, kind: input, shape index: {}]
  %s5 = inlined_call_operand.vmem [shape: f32[1,32], index: 5, kind: input, shape index: {}]
  %s6 = inlined_call_operand.vmem [shape: f32[1,32], index: 6, kind: input, shape index: {}]
  %s7 = inlined_call_operand.hbm [shape: f32[16,64], index: 7, kind: output, shape index: {}]
  %s8 = sld [smem:[#allocation0]]
  $region73: #{carousel_embedder_mag.1} parent=0
    _
  %s10 = ssub.s32 1, %s8
  %s11 = scalar_select 0, %s10, %s8
  $region1: #{carousel_embedder_mag.1} parent=0
    #allocation5 [shape = 'u8[8192]{0}', space=vmem, size = 0x2000, scoped, tag = 'output window, operand 0']
    #allocation6 [shape = 's32[2]{0}', space=sflag, size = 0x8, scoped, tag = 'scoped memory for carousel_embedder_mag.1']
    %12 = vsyncpa [#allocation6], 0
    %s13 = scalar_lea.sflag [#allocation6], 1
    %14 = vsyncpa %s13, 0
    loop: start=0, step=1, limit=6
    $region2: #{carousel_embedder_mag.1} parent=1 // loop_pre_header
      _
    $region3: #{carousel_embedder_mag.1} parent=1 // loop_header
      %s16 = sphi 0, %s20
      %p17 = scmp.ge.s32.totalorder %s16, 6
      %s23 = sphi 0, %s35
      %s24 = sphi 0, %s31
      %s25 = sphi 0, %s23
      %s26 = sphi 0, %s24
      %s27 = sphi 0, %s25
      %s28 = sphi 0, %s26
      %s44 = sphi 0, %s46
      %s47 = sphi 0, %s44
      %s48 = sphi 0, %s47
      %s64 = sphi 0, %s48
      %s70 = sphi 0, %s72
      %s73 = sphi 0, %s70
      %s74 = sphi 0, %s73
      %s90 = sphi 0, %s74
      %s94 = sphi 0, %s94
      %s96 = sphi 0, %s94
      %s97 = sphi 0, %s96
      %s111 = sphi 0, %s97
      %s115 = sphi 0, %s115
      %s117 = sphi 0, %s115
      %s118 = sphi 0, %s117
      %s132 = sphi 0, %s118
      %s136 = sphi 0, %s136
      %s138 = sphi 0, %s136
      %s139 = sphi 0, %s138
      %s153 = sphi 0, %s139
      %s157 = sphi 0, %s157
      %s159 = sphi 0, %s157
      %s160 = sphi 0, %s159
      %s174 = sphi 0, %s160
      %s178 = sphi 0, %s178
      %s180 = sphi 0, %s178
      %s181 = sphi 0, %s180
      %s195 = sphi 0, %s181
      %s203 = sphi 0, %s205
      %s206 = sphi 0, %s203
      %s207 = sphi 0, %s206
      %s223 = sphi 0, %s207
    $region4: #{carousel_embedder_mag.1} parent=1 // loop_header_branch
      %19 = sbr.rel (%p17) target = $region8
    $region5: #{carousel_embedder_mag.1} parent=1 // loop_body
      %s21 = ssub.s32 %s16, 1
      %s22 = ssub.s32 %s16, 2
      %s29 = sadd.s32 1, %s24
      %p30 = scmp.ge.s32.totalorder %s29, 2
      %s31 = scalar_select %p30, 0, %s29
      %s32 = sadd.s32 1, %s23
      %s33 = scalar_select %p30, %s32, %s23
      %p34 = scmp.ge.s32.totalorder %s33, 2
      %s35 = scalar_select %p34, 0, %s33
      %s36 = ssub.s32 1, %s23
      %s37 = smul.u32 %s36, %s24
      %s38 = sadd.s32 %s37, %s23
      %s39 = ssub.s32 1, %s35
      %s40 = smul.u32 %s39, %s31
      %s41 = sadd.s32 %s40, %s35
      %s42 = ssub.s32 %s38, %s41
      %p43 = scmp.eq.s32.totalorder %s42, 0
      %s45 = sadd.s32 %s44, 1
      %s46 = scalar_select %p43, %s44, %s45
      %p49 = pneg %p43
      %p50 = scmp.eq.s32.totalorder %s16, 3
      %p51 = por %p49, %p50
      %p52 = scmp.ne.s32.totalorder %s44, %s47
      %p53 = scmp.eq.s32.totalorder %s16, 0
      %p54 = por %p52, %p53
      %p55 = scmp.ne.s32.totalorder %s44, %s47
      %p56 = scmp.eq.s32.totalorder %s21, 3
      %p57 = por %p55, %p56
      %p58 = scmp.ne.s32.totalorder %s47, %s48
      %p59 = scmp.eq.s32.totalorder %s21, 0
      %p60 = por %p58, %p59
      %p61 = scmp.ne.s32.totalorder %s47, %s48
      %p62 = scmp.eq.s32.totalorder %s22, 3
      %p63 = por %p61, %p62
      %p65 = scmp.ne.s32.totalorder %s48, %s64
      %p66 = scmp.eq.s32.totalorder %s22, 0
      %p67 = por %p65, %p66
      %s68 = ssub.s32 %s24, %s31
      %p69 = scmp.eq.s32.totalorder %s68, 0
      %s71 = sadd.s32 %s70, 1
      %s72 = scalar_select %p69, %s70, %s71
      %p75 = pneg %p69
      %p76 = scmp.eq.s32.totalorder %s16, 3
      %p77 = por %p75, %p76
      %p78 = scmp.ne.s32.totalorder %s70, %s73
      %p79 = scmp.eq.s32.totalorder %s16, 0
      %p80 = por %p78, %p79
      %p81 = scmp.ne.s32.totalorder %s70, %s73
      %p82 = scmp.eq.s32.totalorder %s21, 3
      %p83 = por %p81, %p82
      %p84 = scmp.ne.s32.totalorder %s73, %s74
      %p85 = scmp.eq.s32.totalorder %s21, 0
      %p86 = por %p84, %p85
      %p87 = scmp.ne.s32.totalorder %s73, %s74
      %p88 = scmp.eq.s32.totalorder %s22, 3
      %p89 = por %p87, %p88
      %p91 = scmp.ne.s32.totalorder %s74, %s90
      %p92 = scmp.eq.s32.totalorder %s22, 0
      %p93 = por %p91, %p92
      %s95 = sadd.s32 %s94, 1
      %p98 = scmp.eq.s32.totalorder %s16, 3
      %p99 = scmp.ne.s32.totalorder %s94, %s96
      %p100 = scmp.eq.s32.totalorder %s16, 0
      %p101 = por %p99, %p100
      %p102 = scmp.ne.s32.totalorder %s94, %s96
      %p103 = scmp.eq.s32.totalorder %s21, 3
      %p104 = por %p102, %p103
      %p105 = scmp.ne.s32.totalorder %s96, %s97
      %p106 = scmp.eq.s32.totalorder %s21, 0
      %p107 = por %p105, %p106
      %p108 = scmp.ne.s32.totalorder %s96, %s97
      %p109 = scmp.eq.s32.totalorder %s22, 3
      %p110 = por %p108, %p109
      %p112 = scmp.ne.s32.totalorder %s97, %s111
      %p113 = scmp.eq.s32.totalorder %s22, 0
      %p114 = por %p112, %p113
      %s116 = sadd.s32 %s115, 1
      %p119 = scmp.eq.s32.totalorder %s16, 3
      %p120 = scmp.ne.s32.totalorder %s115, %s117
      %p121 = scmp.eq.s32.totalorder %s16, 0
      %p122 = por %p120, %p121
      %p123 = scmp.ne.s32.totalorder %s115, %s117
      %p124 = scmp.eq.s32.totalorder %s21, 3
      %p125 = por %p123, %p124
      %p126 = scmp.ne.s32.totalorder %s117, %s118
      %p127 = scmp.eq.s32.totalorder %s21, 0
      %p128 = por %p126, %p127
      %p129 = scmp.ne.s32.totalorder %s117, %s118
      %p130 = scmp.eq.s32.totalorder %s22, 3
      %p131 = por %p129, %p130
      %p133 = scmp.ne.s32.totalorder %s118, %s132
      %p134 = scmp.eq.s32.totalorder %s22, 0
      %p135 = por %p133, %p134
      %s137 = sadd.s32 %s136, 1
      %p140 = scmp.eq.s32.totalorder %s16, 3
      %p141 = scmp.ne.s32.totalorder %s136, %s138
      %p142 = scmp.eq.s32.totalorder %s16, 0
      %p143 = por %p141, %p142
      %p144 = scmp.ne.s32.totalorder %s136, %s138
      %p145 = scmp.eq.s32.totalorder %s21, 3
      %p146 = por %p144, %p145
      %p147 = scmp.ne.s32.totalorder %s138, %s139
      %p148 = scmp.eq.s32.totalorder %s21, 0
      %p149 = por %p147, %p148
      %p150 = scmp.ne.s32.totalorder %s138, %s139
      %p151 = scmp.eq.s32.totalorder %s22, 3
      %p152 = por %p150, %p151
      %p154 = scmp.ne.s32.totalorder %s139, %s153
      %p155 = scmp.eq.s32.totalorder %s22, 0
      %p156 = por %p154, %p155
      %s158 = sadd.s32 %s157, 1
      %p161 = scmp.eq.s32.totalorder %s16, 3
      %p162 = scmp.ne.s32.totalorder %s157, %s159
      %p163 = scmp.eq.s32.totalorder %s16, 0
      %p164 = por %p162, %p163
      %p165 = scmp.ne.s32.totalorder %s157, %s159
      %p166 = scmp.eq.s32.totalorder %s21, 3
      %p167 = por %p165, %p166
      %p168 = scmp.ne.s32.totalorder %s159, %s160
      %p169 = scmp.eq.s32.totalorder %s21, 0
      %p170 = por %p168, %p169
      %p171 = scmp.ne.s32.totalorder %s159, %s160
      %p172 = scmp.eq.s32.totalorder %s22, 3
      %p173 = por %p171, %p172
      %p175 = scmp.ne.s32.totalorder %s160, %s174
      %p176 = scmp.eq.s32.totalorder %s22, 0
      %p177 = por %p175, %p176
      %s179 = sadd.s32 %s178, 1
      %p182 = scmp.eq.s32.totalorder %s16, 3
      %p183 = scmp.ne.s32.totalorder %s178, %s180
      %p184 = scmp.eq.s32.totalorder %s16, 0
      %p185 = por %p183, %p184
      %p186 = scmp.ne.s32.totalorder %s178, %s180
      %p187 = scmp.eq.s32.totalorder %s21, 3
      %p188 = por %p186, %p187
      %p189 = scmp.ne.s32.totalorder %s180, %s181
      %p190 = scmp.eq.s32.totalorder %s21, 0
      %p191 = por %p189, %p190
      %p192 = scmp.ne.s32.totalorder %s180, %s181
      %p193 = scmp.eq.s32.totalorder %s22, 3
      %p194 = por %p192, %p193
      %p196 = scmp.ne.s32.totalorder %s181, %s195
      %p197 = scmp.eq.s32.totalorder %s22, 0
      %p198 = por %p196, %p197
      %s199 = smul.u32 %s24, %s23
      %s200 = smul.u32 %s31, %s35
      %s201 = ssub.s32 %s199, %s200
      %p202 = scmp.eq.s32.totalorder %s201, 0
      %s204 = sadd.s32 %s203, 1
      %s205 = scalar_select %p202, %s203, %s204
      %p208 = pneg %p202
      %p209 = scmp.eq.s32.totalorder %s16, 3
      %p210 = por %p208, %p209
      %p211 = scmp.ne.s32.totalorder %s203, %s206
      %p212 = scmp.eq.s32.totalorder %s16, 0
      %p213 = por %p211, %p212
      %p214 = scmp.ne.s32.totalorder %s203, %s206
      %p215 = scmp.eq.s32.totalorder %s21, 3
      %p216 = por %p214, %p215
      %p217 = scmp.ne.s32.totalorder %s206, %s207
      %p218 = scmp.eq.s32.totalorder %s21, 0
      %p219 = por %p217, %p218
      %p220 = scmp.ne.s32.totalorder %s206, %s207
      %p221 = scmp.eq.s32.totalorder %s22, 3
      %p222 = por %p220, %p221
      %p224 = scmp.ne.s32.totalorder %s207, %s223
      %p225 = scmp.eq.s32.totalorder %s22, 0
      %p226 = por %p224, %p225
      %p227 = scmp.le.s32.totalorder 1, %s16
      %p228 = scmp.lt.s32.totalorder %s16, 5
      %p229 = pnand %p227, %p228
      %p230 = pneg %p229
      // Predicated region
      $region9: #{carousel_embedder_mag.1} parent=5 // pred_check
        _
      $region10: #{carousel_embedder_mag.1} parent=5 // pred_check_branch
        %232 = sbr.rel (%p229) target = $region12
      $region11: #{carousel_embedder_mag.1} parent=5 // pred_region
        %s233 = ssub.s32 %s16, 1
        // Predicated region
        $region13: #{carousel_embedder_mag.1} parent=11 // pred_check
          %p234 = pneg %p107
        $region14: #{carousel_embedder_mag.1} parent=11 // pred_check_branch
          %236 = sbr.rel (%p234) target = $region16
        $region15: #{carousel_embedder_mag.1} parent=11 // pred_region
          _
        $region16: #{carousel_embedder_mag.1} parent=11 // pred_fallthru
          _
        // Predicated region
        $region17: #{carousel_embedder_mag.1} parent=11 // pred_check
          %p237 = pneg %p128
        $region18: #{carousel_embedder_mag.1} parent=11 // pred_check_branch
          %239 = sbr.rel (%p237) target = $region20
        $region19: #{carousel_embedder_mag.1} parent=11 // pred_region
          _
        $region20: #{carousel_embedder_mag.1} parent=11 // pred_fallthru
          _
        // Predicated region
        $region21: #{carousel_embedder_mag.1} parent=11 // pred_check
          %p240 = pneg %p149
        $region22: #{carousel_embedder_mag.1} parent=11 // pred_check_branch
          %242 = sbr.rel (%p240) target = $region24
        $region23: #{carousel_embedder_mag.1} parent=11 // pred_region
          _
        $region24: #{carousel_embedder_mag.1} parent=11 // pred_fallthru
          _
        // Predicated region
        $region25: #{carousel_embedder_mag.1} parent=11 // pred_check
          %p243 = pneg %p170
        $region26: #{carousel_embedder_mag.1} parent=11 // pred_check_branch
          %245 = sbr.rel (%p243) target = $region28
        $region27: #{carousel_embedder_mag.1} parent=11 // pred_region
          _
        $region28: #{carousel_embedder_mag.1} parent=11 // pred_fallthru
          _
        // Predicated region
        $region29: #{carousel_embedder_mag.1} parent=11 // pred_check
          %p246 = pneg %p191
        $region30: #{carousel_embedder_mag.1} parent=11 // pred_check_branch
          %248 = sbr.rel (%p246) target = $region32
        $region31: #{carousel_embedder_mag.1} parent=11 // pred_region
          _
        $region32: #{carousel_embedder_mag.1} parent=11 // pred_fallthru
          _
      $region12: #{carousel_embedder_mag.1} parent=5 // pred_fallthru
        _
      %p249 = scmp.lt.s32.totalorder %s16, 4
      // Predicated region
      $region33: #{carousel_embedder_mag.1} parent=5 // pred_check
        %p250 = pneg %p249
      $region34: #{carousel_embedder_mag.1} parent=5 // pred_check_branch
        %252 = sbr.rel (%p250) target = $region36
      $region35: #{carousel_embedder_mag.1} parent=5 // pred_region
        // Predicated region
        $region37: #{carousel_embedder_mag.1} parent=35 // pred_check
          %p253 = pneg %p54
        $region38: #{carousel_embedder_mag.1} parent=35 // pred_check_branch
          %255 = sbr.rel (%p253) target = $region40
        $region39: #{carousel_embedder_mag.1} parent=35 // pred_region
          %s256 = ssub.s32 1, %s23
          %s257 = smul.u32 %s256, %s24
          %s258 = sadd.s32 %s257, %s23
          %p259 = scmp.lt.s32.totalorder %s258, 1
          %s260 = scalar_select %p259, %s258, 1
          %s261 = smul.addr %s260, 3
          %s262 = smul.addr %s261, 8
          %s263 = scalar_lea.vmem %s0, %s262
          %s264 = ssub.s32 1, %s23
          %s265 = smul.u32 %s264, %s24
          %s266 = sadd.s32 %s265, %s23
        $region40: #{carousel_embedder_mag.1} parent=35 // pred_fallthru
          _
        // Predicated region
        $region41: #{carousel_embedder_mag.1} parent=35 // pred_check
          %p267 = pneg %p80
        $region42: #{carousel_embedder_mag.1} parent=35 // pred_check_branch
          %269 = sbr.rel (%p267) target = $region44
        $region43: #{carousel_embedder_mag.1} parent=35 // pred_region
          %p270 = scmp.lt.s32.totalorder %s24, 1
          %s271 = scalar_select %p270, %s24, 1
          %s272 = smul.addr %s271, 8
          %s273 = scalar_lea.vmem %s1, %s272
        $region44: #{carousel_embedder_mag.1} parent=35 // pred_fallthru
          _
      $region36: #{carousel_embedder_mag.1} parent=5 // pred_fallthru
        _
      %p274 = scmp.le.s32.totalorder 1, %s16
      %p275 = scmp.lt.s32.totalorder %s16, 5
      %p276 = pnand %p274, %p275
      %p277 = pneg %p276
      // Predicated region
      $region45: #{carousel_embedder_mag.1} parent=5 // pred_check
        _
      $region46: #{carousel_embedder_mag.1} parent=5 // pred_check_branch
        %279 = sbr.rel (%p276) target = $region48
      $region47: #{carousel_embedder_mag.1} parent=5 // pred_region
        %s280 = ssub.s32 %s16, 1
        %s281 = ssub.s32 1, %s25
        %s282 = smul.u32 %s281, %s26
        %s283 = sadd.s32 %s282, %s25
        %p284 = scmp.lt.s32.totalorder %s283, 1
        %s285 = scalar_select %p284, %s283, 1
        %s286 = smul.addr %s285, 3
        %s287 = smul.addr %s286, 8
        %s288 = scalar_lea.vmem %s0, %s287
        %p289 = pneg %p60
        %p290 = pneg %p57
        %p291 = scmp.lt.s32.totalorder %s26, 1
        %s292 = scalar_select %p291, %s26, 1
        %s293 = smul.addr %s292, 8
        %s294 = scalar_lea.vmem %s1, %s293
        %p295 = pneg %p86
        %p296 = pneg %p83
        %p297 = pneg %p107
        %p298 = pneg %p104
        %p299 = pneg %p128
        %p300 = pneg %p125
        %p301 = pneg %p149
        %p302 = pneg %p146
        %p303 = pneg %p170
        %p304 = pneg %p167
        %p305 = pneg %p191
        %p306 = pneg %p188
        %p307 = pneg %p219
        %p308 = pneg %p216
        %s309 = sand.u32 %s206, 1
        %s310 = scalar_lea.sflag [#allocation6], %s309
        %s311 = sand.u32 %s206, 1
        %s312 = smul.addr %s311, 8
        %s313 = scalar_lea.vmem [#allocation5], %s312
        %s314 = ssub.s32 1, %s25
        %s315 = smul.u32 %s314, %s26
        %s316 = sadd.s32 %s315, %s25
        %p317 = scmp.lt.s32.totalorder %s316, 1
        %s318 = scalar_select %p317, %s316, 1
        %s319 = smul.addr %s318, 3
        %s320 = smul.addr %s319, 8
        %s321 = scalar_lea.vmem %s0, %s320
        %s322 = ssub.s32 1, %s25
        %s323 = smul.u32 %s322, %s26
        %s324 = sadd.s32 %s323, %s25
        %p325 = scmp.lt.s32.totalorder %s26, 1
        %s326 = scalar_select %p325, %s26, 1
        %s327 = smul.addr %s326, 8
        %s328 = scalar_lea.vmem %s1, %s327
        %s329 = smul.u32 %s26, %s25
        %p330 = scmp.eq.s32.totalorder %s25, 0
        // Predicated region
        $region49: #{carousel_embedder_mag.1} parent=47 // pred_check
          %p331 = pneg %p330
        $region50: #{carousel_embedder_mag.1} parent=47 // pred_check_branch
          %333 = sbr.rel (%p331) target = $region52
        $region51: #{carousel_embedder_mag.1} parent=47 // pred_region
          %v334 = vld [vmem:[%s328] sm:$0xff]
          %v335 = vld [vmem:[%s321] sm:$0xff]
          %v336 = vld [vmem:[%s321 + $0x8] sm:$0xff]
          %v337 = vld [vmem:[%s321 + $0x10] sm:$0xff]
          %v338 = vld [vmem:[%s2] sm:$0xff]
          %v339 = vld [vmem:[%s2 + $0x8] sm:$0xff]
          %v340 = vld [vmem:[%s2 + $0x10] sm:$0xff]
          %v341 = vld [vmem:[%s2 + $0x18] sm:$0xff]
          %v342 = vld [vmem:[%s2 + $0x20] sm:$0xff]
          %v343 = vld [vmem:[%s2 + $0x28] sm:$0xff]
          %v344 = vld [vmem:[%s2 + $0x30] sm:$0xff]
          %v345 = vld [vmem:[%s2 + $0x38] sm:$0xff]
          %v346 = vld [vmem:[%s2 + $0x40] sm:$0xff]
          %v347 = vld [vmem:[%s2 + $0x48] sm:$0xff]
          %v348 = vld [vmem:[%s2 + $0x50] sm:$0xff]
          %v349 = vld [vmem:[%s2 + $0x58] sm:$0xff]
          %v350 = vld [vmem:[%s2 + $0x60] sm:$0xff]
          %v351 = vld [vmem:[%s2 + $0x68] sm:$0xff]
          %v352 = vld [vmem:[%s2 + $0x70] sm:$0xff]
          %v353 = vld [vmem:[%s2 + $0x78] sm:$0xff]
          %v354 = vld [vmem:[%s2 + $0x80] sm:$0xff]
          %v355 = vld [vmem:[%s2 + $0x88] sm:$0xff]
          %v356 = vld [vmem:[%s2 + $0x90] sm:$0xff]
          %v357 = vld [vmem:[%s2 + $0x98] sm:$0xff]
          %v358 = vld [vmem:[%s2 + $0xa0] sm:$0xff]
          %v359 = vld [vmem:[%s2 + $0xa8] sm:$0xff]
          %v360 = vld [vmem:[%s2 + $0xb0] sm:$0xff]
          %v361 = vld [vmem:[%s2 + $0xb8] sm:$0xff]
          %v362 = vld [vmem:[%s2 + $0xc0] sm:$0xff]
          %v363 = vld [vmem:[%s2 + $0xc8] sm:$0xff]
          %v364 = vld [vmem:[%s2 + $0xd0] sm:$0xff]
          %v365 = vld [vmem:[%s2 + $0xd8] sm:$0xff]
          %v366 = vld [vmem:[%s2 + $0xe0] sm:$0xff]
          %v367 = vld [vmem:[%s2 + $0xe8] sm:$0xff]
          %v368 = vld [vmem:[%s2 + $0xf0] sm:$0xff]
          %v369 = vld [vmem:[%s2 + $0xf8] sm:$0xff]
          %v370 = vld [vmem:[%s2 + $0x100] sm:$0xff]
          %v371 = vld [vmem:[%s2 + $0x108] sm:$0xff]
          %v372 = vld [vmem:[%s2 + $0x110] sm:$0xff]
          %v373 = vld [vmem:[%s2 + $0x118] sm:$0xff]
          %v374 = vld [vmem:[%s2 + $0x120] sm:$0xff]
          %v375 = vld [vmem:[%s2 + $0x128] sm:$0xff]
          %v376 = vld [vmem:[%s2 + $0x130] sm:$0xff]
          %v377 = vld [vmem:[%s2 + $0x138] sm:$0xff]
          %v378 = vld [vmem:[%s2 + $0x140] sm:$0xff]
          %v379 = vld [vmem:[%s2 + $0x148] sm:$0xff]
          %v380 = vld [vmem:[%s2 + $0x150] sm:$0xff]
          %v381 = vld [vmem:[%s2 + $0x158] sm:$0xff]
          %v382 = vld [vmem:[%s2 + $0x160] sm:$0xff]
          %v383 = vld [vmem:[%s2 + $0x168] sm:$0xff]
          %v384 = vld [vmem:[%s2 + $0x170] sm:$0xff]
          %v385 = vld [vmem:[%s2 + $0x178] sm:$0xff]
          %v386 = vld [vmem:[%s4] sm:$0x1]
          %v388 = vlaneseq
          %v389 = vshrl.u32 %v388, 7
          %v390 = vsub.s32 0, %v389
          %v391 = vrot.slane %v386, %v390
          %393 = vmatprep.subr.mxu0 0.0
          %394 = vmatpush1.msra.mxu0 %v338
          %395 = vmatprep.subr.mxu0 0.0
          %396 = vmatpush1.msra.mxu0 %v339
          %397 = vmatprep.subr.mxu0 0.0
          %398 = vmatpush1.msra.mxu0 %v340
          %399 = vmatprep.subr.mxu0 0.0
          %400 = vmatpush1.msra.mxu0 %v341
          %401 = vmatprep.subr.mxu0 0.0
          %402 = vmatpush1.msra.mxu0 %v342
          %403 = vmatprep.subr.mxu0 0.0
          %404 = vmatpush1.msra.mxu0 %v343
          %405 = vmatprep.subr.mxu0 0.0
          %406 = vmatpush1.msra.mxu0 %v344
          %407 = vmatprep.subr.mxu0 0.0
          %408 = vmatpush1.msra.mxu0 %v345
          %409 = vmatprep.subr.mxu0 0.0
          %410 = vmatpush1.msra.mxu0 %v346
          %411 = vmatprep.subr.mxu0 0.0
          %412 = vmatpush1.msra.mxu0 %v347
          %413 = vmatprep.subr.mxu0 0.0
          %414 = vmatpush1.msra.mxu0 %v348
          %415 = vmatprep.subr.mxu0 0.0
          %416 = vmatpush1.msra.mxu0 %v349
          %417 = vmatprep.subr.mxu0 0.0
          %418 = vmatpush1.msra.mxu0 %v350
          %419 = vmatprep.subr.mxu0 0.0
          %420 = vmatpush1.msra.mxu0 %v351
          %421 = vmatprep.subr.mxu0 0.0
          %422 = vmatpush1.msra.mxu0 %v352
          %423 = vmatprep.subr.mxu0 0.0
          %424 = vmatpush1.msra.mxu0 %v353
          %425 = vmatprep.subr.mxu0 0.0
          %426 = vmatpush1.msra.mxu0 %v354
          %427 = vmatprep.subr.mxu0 0.0
          %428 = vmatpush1.msra.mxu0 %v355
          %429 = vmatprep.subr.mxu0 0.0
          %430 = vmatpush1.msra.mxu0 %v356
          %431 = vmatprep.subr.mxu0 0.0
          %432 = vmatpush1.msra.mxu0 %v357
          %433 = vmatprep.subr.mxu0 0.0
          %434 = vmatpush1.msra.mxu0 %v358
          %435 = vmatprep.subr.mxu0 0.0
          %436 = vmatpush1.msra.mxu0 %v359
          %437 = vmatprep.subr.mxu0 0.0
          %438 = vmatpush1.msra.mxu0 %v360
          %439 = vmatprep.subr.mxu0 0.0
          %440 = vmatpush1.msra.mxu0 %v361
          %441 = vmatprep.subr.mxu0 0.0
          %442 = vmatpush1.msra.mxu0 %v362
          %443 = vmatprep.subr.mxu0 0.0
          %444 = vmatpush1.msra.mxu0 %v363
          %445 = vmatprep.subr.mxu0 0.0
          %446 = vmatpush1.msra.mxu0 %v364
          %447 = vmatprep.subr.mxu0 0.0
          %448 = vmatpush1.msra.mxu0 %v365
          %449 = vmatprep.subr.mxu0 0.0
          %450 = vmatpush1.msra.mxu0 %v366
          %451 = vmatprep.subr.mxu0 0.0
          %452 = vmatpush1.msra.mxu0 %v367
          %453 = vmatprep.subr.mxu0 0.0
          %454 = vmatpush1.msra.mxu0 %v368
          %455 = vmatprep.subr.mxu0 0.0
          %456 = vmatpush1.msra.mxu0 %v369
          %457 = vmatprep.mubr.f32.mxu0 %v336
          %458 = vmatmul.mubr.f32.gmra.mrb[0].mxu0 %v335
          %v459 = vpop.f32.mrb[0].mxu0
          %v460 = vadd.f32 %v391, %v459
          %v461 = vpop.f32.mrb[0].mxu0
          %462 = vdwg.mxu0
          %463 = vmatprep.subr.mxu0 0.0
          %464 = vmatpush1.msra.mxu0 %v370
          %465 = vmatprep.subr.mxu0 0.0
          %466 = vmatpush1.msra.mxu0 %v371
          %467 = vmatprep.subr.mxu0 0.0
          %468 = vmatpush1.msra.mxu0 %v372
          %469 = vmatprep.subr.mxu0 0.0
          %470 = vmatpush1.msra.mxu0 %v373
          %471 = vmatprep.subr.mxu0 0.0
          %472 = vmatpush1.msra.mxu0 %v374
          %473 = vmatprep.subr.mxu0 0.0
          %474 = vmatpush1.msra.mxu0 %v375
          %475 = vmatprep.subr.mxu0 0.0
          %476 = vmatpush1.msra.mxu0 %v376
          %477 = vmatprep.subr.mxu0 0.0
          %478 = vmatpush1.msra.mxu0 %v377
          %479 = vmatprep.subr.mxu0 0.0
          %480 = vmatpush1.msra.mxu0 %v378
          %481 = vmatprep.subr.mxu0 0.0
          %482 = vmatpush1.msra.mxu0 %v379
          %483 = vmatprep.subr.mxu0 0.0
          %484 = vmatpush1.msra.mxu0 %v380
          %485 = vmatprep.subr.mxu0 0.0
          %486 = vmatpush1.msra.mxu0 %v381
          %487 = vmatprep.subr.mxu0 0.0
          %488 = vmatpush1.msra.mxu0 %v382
          %489 = vmatprep.subr.mxu0 0.0
          %490 = vmatpush1.msra.mxu0 %v383
          %491 = vmatprep.subr.mxu0 0.0
          %492 = vmatpush1.msra.mxu0 %v384
          %493 = vmatprep.subr.mxu0 0.0
          %494 = vmatpush1.msra.mxu0 %v385
          %495 = vmatprep.subr.mxu0 0.0
          %496 = vmatpush1.msra.mxu0 0.0
          %497 = vmatprep.subr.mxu0 0.0
          %498 = vmatpush1.msra.mxu0 0.0
          %499 = vmatprep.subr.mxu0 0.0
          %500 = vmatpush1.msra.mxu0 0.0
          %501 = vmatprep.subr.mxu0 0.0
          %502 = vmatpush1.msra.mxu0 0.0
          %503 = vmatprep.subr.mxu0 0.0
          %504 = vmatpush1.msra.mxu0 0.0
          %505 = vmatprep.subr.mxu0 0.0
          %506 = vmatpush1.msra.mxu0 0.0
          %507 = vmatprep.subr.mxu0 0.0
          %508 = vmatpush1.msra.mxu0 0.0
          %509 = vmatprep.subr.mxu0 0.0
          %510 = vmatpush1.msra.mxu0 0.0
          %511 = vmatprep.subr.mxu0 0.0
          %512 = vmatpush1.msra.mxu0 0.0
          %513 = vmatprep.subr.mxu0 0.0
          %514 = vmatpush1.msra.mxu0 0.0
          %515 = vmatprep.subr.mxu0 0.0
          %516 = vmatpush1.msra.mxu0 0.0
          %517 = vmatprep.subr.mxu0 0.0
          %518 = vmatpush1.msra.mxu0 0.0
          %519 = vmatprep.subr.mxu0 0.0
          %520 = vmatpush1.msra.mxu0 0.0
          %521 = vmatprep.subr.mxu0 0.0
          %522 = vmatpush1.msra.mxu0 0.0
          %523 = vmatprep.subr.mxu0 0.0
          %524 = vmatpush1.msra.mxu0 0.0
          %525 = vmatprep.subr.mxu0 0.0
          %526 = vmatpush1.msra.mxu0 0.0
          %527 = vmatprep.mubr.f32.mxu0 0.0
          %528 = vmatmul.mubr.f32.gmra.mrb[0].mxu0 %v337
          %v529 = vpop.f32.mrb[0].mxu0
          %v530 = vadd.f32 %v460, %v529
          %v531 = vpop.f32.mrb[0].mxu0
          %532 = vdwg.mxu0
          %v533 = vld [vmem:[%s3] sm:$0xff]
          %v534 = vld [vmem:[%s3 + $0x8] sm:$0xff]
          %v535 = vld [vmem:[%s3 + $0x10] sm:$0xff]
          %v536 = vld [vmem:[%s3 + $0x18] sm:$0xff]
          %vm537 = vcmask 261120
          %v539 = vsel %vm537, %v334, 0
          %541 = vmatprep.subr.mxu0 0.0
          %542 = vmatpush1.msra.mxu0 %v533
          %543 = vmatprep.subr.mxu0 0.0
          %544 = vmatpush1.msra.mxu0 %v534
          %545 = vmatprep.subr.mxu0 0.0
          %546 = vmatpush1.msra.mxu0 %v535
          %547 = vmatprep.subr.mxu0 0.0
          %548 = vmatpush1.msra.mxu0 %v536
          %549 = vmatprep.subr.mxu0 0.0
          %550 = vmatpush1.msra.mxu0 0.0
          %551 = vmatprep.subr.mxu0 0.0
          %552 = vmatpush1.msra.mxu0 0.0
          %553 = vmatprep.subr.mxu0 0.0
          %554 = vmatpush1.msra.mxu0 0.0
          %555 = vmatprep.subr.mxu0 0.0
          %556 = vmatpush1.msra.mxu0 0.0
          %557 = vmatprep.subr.mxu0 0.0
          %558 = vmatpush1.msra.mxu0 0.0
          %559 = vmatprep.subr.mxu0 0.0
          %560 = vmatpush1.msra.mxu0 0.0
          %561 = vmatprep.subr.mxu0 0.0
          %562 = vmatpush1.msra.mxu0 0.0
          %563 = vmatprep.subr.mxu0 0.0
          %564 = vmatpush1.msra.mxu0 0.0
          %565 = vmatprep.subr.mxu0 0.0
          %566 = vmatpush1.msra.mxu0 0.0
          %567 = vmatprep.subr.mxu0 0.0
          %568 = vmatpush1.msra.mxu0 0.0
          %569 = vmatprep.subr.mxu0 0.0
          %570 = vmatpush1.msra.mxu0 0.0
          %571 = vmatprep.subr.mxu0 0.0
          %572 = vmatpush1.msra.mxu0 0.0
          %573 = vmatprep.subr.mxu0 0.0
          %574 = vmatpush1.msra.mxu0 0.0
          %575 = vmatprep.subr.mxu0 0.0
          %576 = vmatpush1.msra.mxu0 0.0
          %577 = vmatprep.subr.mxu0 0.0
          %578 = vmatpush1.msra.mxu0 0.0
          %579 = vmatprep.subr.mxu0 0.0
          %580 = vmatpush1.msra.mxu0 0.0
          %581 = vmatprep.subr.mxu0 0.0
          %582 = vmatpush1.msra.mxu0 0.0
          %583 = vmatprep.subr.mxu0 0.0
          %584 = vmatpush1.msra.mxu0 0.0
          %585 = vmatprep.subr.mxu0 0.0
          %586 = vmatpush1.msra.mxu0 0.0
          %587 = vmatprep.subr.mxu0 0.0
          %588 = vmatpush1.msra.mxu0 0.0
          %589 = vmatprep.subr.mxu0 0.0
          %590 = vmatpush1.msra.mxu0 0.0
          %591 = vmatprep.subr.mxu0 0.0
          %592 = vmatpush1.msra.mxu0 0.0
          %593 = vmatprep.subr.mxu0 0.0
          %594 = vmatpush1.msra.mxu0 0.0
          %595 = vmatprep.subr.mxu0 0.0
          %596 = vmatpush1.msra.mxu0 0.0
          %597 = vmatprep.subr.mxu0 0.0
          %598 = vmatpush1.msra.mxu0 0.0
          %599 = vmatprep.subr.mxu0 0.0
          %600 = vmatpush1.msra.mxu0 0.0
          %601 = vmatprep.subr.mxu0 0.0
          %602 = vmatpush1.msra.mxu0 0.0
          %603 = vmatprep.subr.mxu0 0.0
          %604 = vmatpush1.msra.mxu0 0.0
          %605 = vmatprep.mubr.f32.mxu0 0.0
          %606 = vmatmul.mubr.f32.gmra.mrb[0].mxu0 %v539
          %v607 = vpop.f32.mrb[0].mxu0
          %v608 = vadd.f32 0.0, %v607
          %v609 = vpop.f32.mrb[0].mxu0
          %610 = vdwg.mxu0
          %v611 = vadd.f32 %v530, %v608
          %v612 = vtanh.pop %v611
          %614 = vrot.lane.b32.xlu0 %v530, 96
          %v615 = vpop.permute.xlu0 %614
          %v617 = vmul.f32 %v612, %v615
          %s618 = smul.u32 %s26, 8
          %s619 = scalar_lea.vmem [#allocation2], %s618
          %620 = vst.msk [vmem:[%s619] sm:$0xff] %vm537, %v617
          %p621 = scmp.eq.s32.totalorder %s26, 0
          // Predicated region
          $region53: #{carousel_embedder_mag.1} parent=51 // pred_check
            %p622 = pneg %p621
          $region54: #{carousel_embedder_mag.1} parent=51 // pred_check_branch
            %624 = sbr.rel (%p622) target = $region56
          $region55: #{carousel_embedder_mag.1} parent=51 // pred_region
            %vm625 = vcmask 0
            %626 = vst.msk [vmem:[#allocation3] sm:$0x1] %vm625, 0.0
            %627 = vst.msk [vmem:[#allocation4] sm:$0x1] %vm625, 0.0
          $region56: #{carousel_embedder_mag.1} parent=51 // pred_fallthru
            _
          %v628 = vld [vmem:[#allocation3] sm:$0x1]
          %v629 = vmul.f32 %v334, %v334
          %v630 = vsel %vm537, %v629, 0.0
          %631 = vadd.xlane.f32.xlu0 %v630
          %v632 = vpop.xlane.xlu0 %631
          %v633 = vrot.slane %v632, 4
          %v634 = vadd.f32 %v632, %v633
          %v635 = vrot.slane %v634, 2
          %v636 = vadd.f32 %v634, %v635
          %v637 = vrot.slane %v636, 1
          %v638 = vadd.f32 %v636, %v637
          %s639 = vtos %v638
          %v640 = vstv %s639
          %v641 = vadd.f32 %v628, %v640
          %vm642 = vcmask 0
          %643 = vst.msk [vmem:[#allocation3] sm:$0x1] %vm642, %v641
          %v644 = vld [vmem:[#allocation4] sm:$0x1]
          %v645 = vmul.f32 %v617, %v617
          %v646 = vsel %vm537, %v645, 0.0
          %647 = vadd.xlane.f32.xlu0 %v646
          %v648 = vpop.xlane.xlu0 %647
          %v649 = vrot.slane %v648, 4
          %v650 = vadd.f32 %v648, %v649
          %v651 = vrot.slane %v650, 2
          %v652 = vadd.f32 %v650, %v651
          %v653 = vrot.slane %v652, 1
          %v654 = vadd.f32 %v652, %v653
          %s655 = vtos %v654
          %v656 = vstv %s655
          %v657 = vadd.f32 %v644, %v656
          %658 = vst.msk [vmem:[#allocation4] sm:$0x1] %vm642, %v657
        $region52: #{carousel_embedder_mag.1} parent=47 // pred_fallthru
          _
        %p659 = scmp.eq.s32.totalorder %s25, 1
        // Predicated region
        $region57: #{carousel_embedder_mag.1} parent=47 // pred_check
          %p660 = pneg %p659
        $region58: #{carousel_embedder_mag.1} parent=47 // pred_check_branch
          %662 = sbr.rel (%p660) target = $region60
        $region59: #{carousel_embedder_mag.1} parent=47 // pred_region
          %v663 = vld [vmem:[%s328] sm:$0xff]
          %v664 = vld [vmem:[#allocation3] sm:$0x1]
          %v665 = vrsqrt.pop %v664
          %v666 = vmul.f32 %v664, %v665
          %vm667 = vcmp.eq.f32.partialorder %v664, inf
          %v668 = vsel %vm667, %v664, %v666
          %vm669 = vcmp.eq.f32.partialorder %v664, 0.0
          %v670 = vand.u32 %v664, 2147483648
          %v671 = vsel %vm669, %v670, %v668
          %v672 = vmul.f32 %v671, 0.75
          %v673 = vld [vmem:[#allocation4] sm:$0x1]
          %v674 = vrsqrt.pop %v673
          %v675 = vmul.f32 %v673, %v674
          %vm676 = vcmp.eq.f32.partialorder %v673, inf
          %v677 = vsel %vm676, %v673, %v675
          %vm678 = vcmp.eq.f32.partialorder %v673, 0.0
          %v679 = vand.u32 %v673, 2147483648
          %v680 = vsel %vm678, %v679, %v677
          %v681 = vrcp.pop %v680
          %v682 = vmul.f32 %v672, %v681
          %v683 = vmin.f32 %v682, 1.0
          %s684 = smul.u32 %s26, 8
          %s685 = scalar_lea.vmem [#allocation2], %s684
          %v686 = vld [vmem:[%s685] sm:$0xff]
          %v688 = vlaneseq
          %v689 = vshrl.u32 %v688, 7
          %v690 = vsub.s32 0, %v689
          %v691 = vrot.slane %v683, %v690
          %692 = vset.pattern.permute.xlu0 0
          %693 = vperm.xlu0 %692, %v691
          %v694 = vpop.permute.xlu0 %693
          %v696 = vmul.f32 %v694, %v686
          %v697 = vadd.f32 %v663, %v696
          %vm698 = vcmask 261120
          %v699 = vsel %vm698, %v697, 0.0
          %700 = vadd.xlane.f32.xlu0 %v699
          %v701 = vpop.xlane.xlu0 %700
          %v702 = vrcp.pop 32.0
          %v703 = vmul.f32 %v701, %v702
          %v704 = vsub.f32 %v697, %v703
          %v705 = vmul.f32 %v704, %v704
          %v706 = vsel %vm698, %v705, 0.0
          %707 = vadd.xlane.f32.xlu0 %v706
          %v708 = vpop.xlane.xlu0 %707
          %v709 = vmul.f32 %v708, %v702
          %v710 = vadd.f32 %v709, 1e-05
          %v711 = vrsqrt.pop %v710
          %v712 = vmul.f32 %v704, %v711
          %v713 = vld [vmem:[%s5] sm:$0x1]
          %v715 = vlaneseq
          %v716 = vshrl.u32 %v715, 7
          %v717 = vsub.s32 0, %v716
          %v718 = vrot.slane %v713, %v717
          %v720 = vmul.f32 %v712, %v718
          %v721 = vld [vmem:[%s6] sm:$0x1]
          %v723 = vlaneseq
          %v724 = vshrl.u32 %v723, 7
          %v725 = vsub.s32 0, %v724
          %v726 = vrot.slane %v721, %v725
          %v728 = vadd.f32 %v720, %v726
          %730 = vrot.lane.b32.xlu0 %v663, 32
          %v731 = vpop.permute.xlu0 %730
          %v733 = vsel %vm698, %v728, %v731
          %vm734 = vcmask 523264
          %735 = vst.msk [vmem:[%s313] sm:$0xff] %vm734, %v733
        $region60: #{carousel_embedder_mag.1} parent=47 // pred_fallthru
          _
        %s736 = sand.u32 %s206, 1
        %s737 = scalar_lea.sflag [#allocation6], %s736
        %s738 = sand.u32 %s206, 1
        %s739 = smul.addr %s738, 8
        %s740 = scalar_lea.vmem [#allocation5], %s739
        // Predicated region
        $region61: #{carousel_embedder_mag.1} parent=47 // pred_check
          %p741 = pneg %p216
        $region62: #{carousel_embedder_mag.1} parent=47 // pred_check_branch
          %743 = sbr.rel (%p741) target = $region64
        $region63: #{carousel_embedder_mag.1} parent=47 // pred_region
          %s744 = smul.u32 %s26, %s25
          %s746 = ssub.s32 128, 128
          %747 = vsyncadd %s737, %s746
          %s748 = smul.addr %s744, 128
          %s749 = scalar_lea.hbm %s7, %s748
          %s751 = sshll.u32 %s740, 4
          %s752 = int_to_ptr.vmem [resolvable:$true] %s751
          %754 = dma.vmem_to_hbm [thread:$0]  %s752, 128, %s749, %s737
        $region64: #{carousel_embedder_mag.1} parent=47 // pred_fallthru
          _
      $region48: #{carousel_embedder_mag.1} parent=5 // pred_fallthru
        _
      %p755 = scmp.le.s32.totalorder 2, %s16
      // Predicated region
      $region65: #{carousel_embedder_mag.1} parent=5 // pred_check
        %p756 = pneg %p755
      $region66: #{carousel_embedder_mag.1} parent=5 // pred_check_branch
        %758 = sbr.rel (%p756) target = $region68
      $region67: #{carousel_embedder_mag.1} parent=5 // pred_region
        %s759 = ssub.s32 %s16, 2
        // Predicated region
        $region69: #{carousel_embedder_mag.1} parent=67 // pred_check
          %p760 = pneg %p222
        $region70: #{carousel_embedder_mag.1} parent=67 // pred_check_branch
          %762 = sbr.rel (%p760) target = $region72
        $region71: #{carousel_embedder_mag.1} parent=67 // pred_region
          %s763 = sand.u32 %s207, 1
          %s764 = scalar_lea.sflag [#allocation6], %s763
          %s765 = sand.u32 %s207, 1
          %s766 = smul.addr %s765, 8
          %s767 = scalar_lea.vmem [#allocation5], %s766
          %768 = dma.done %s764, 128
        $region72: #{carousel_embedder_mag.1} parent=67 // pred_fallthru
          _
      $region68: #{carousel_embedder_mag.1} parent=5 // pred_fallthru
        _
    $region6: #{carousel_embedder_mag.1} parent=1 // loop_footer
      %s20 = sadd.s32 1, %s16
    $region7: #{carousel_embedder_mag.1} parent=1 // loop_footer_branch
      %15 = sbr.rel target = $region3
    $region8: #{carousel_embedder_mag.1} parent=1 // loop_exit
      _
    %769 = vsyncpa [#allocation6], 1
    %s770 = scalar_lea.sflag [#allocation6], 1
    %771 = vsyncpa %s770, 1

</llo_original>
